<compile_context>
chip_gen: v6e
topology: v6e:2x2x1
jax: 0.10.0
libtpu: 0.0.40
codegen_flags: <defaults>
</compile_context>

<pallas_src>
import jax
import jax.numpy as jnp
from jax.experimental import pallas as pl
from jax.experimental.pallas import tpu as pltpu


# --------------------------------------------------------------------------- kernels
def _pos_from_mov_kernel(lane_base_m1_ref, lane_ystep_ref, mov_ref, out_ref):
    """pos = mov*2 + (lane_base_m1 + folded_row * lane_ystep), one (TR, LW) slab."""
    tr, lw = out_ref.shape
    fr = jax.lax.broadcasted_iota(jnp.int32, (tr, lw), 0) + pl.program_id(1) * tr
    ident2m1 = lane_base_m1_ref[...] + fr.astype(jnp.float32) * lane_ystep_ref[...]
    out_ref[...] = mov_ref[...] * 2.0 + ident2m1


def _pos_identity_kernel(lane_base_m1_ref, lane_ystep_ref, out_ref):
    """Identity sampling grid (specified_grid is None): write-only, no mov read stream."""
    tr, lw = out_ref.shape
    fr = jax.lax.broadcasted_iota(jnp.int32, (tr, lw), 0) + pl.program_id(1) * tr
    out_ref[...] = lane_base_m1_ref[...] + fr.astype(jnp.float32) * lane_ystep_ref[...]


# --------------------------------------------------------------------------- tiling helpers
def _pick_lane_fold(H, lane0):
    """Smallest divisor F of H with F*lane0 >= 128 (lane-dense stores); else F = H."""
    for f in range(1, H + 1):
        if H % f == 0 and f * lane0 >= 128:
            return f
    return H


def _pick_row_block(R, LW, elem_bytes=4, budget_bytes=2 * 1024 * 1024):
    """Largest row tile that divides R and fits a ~2 MiB/block budget (v7x-safe)."""
    max_rows = max(budget_bytes // (LW * elem_bytes), 1)
    if R <= max_rows:
        return R                      # full extent -> always a legal block dim
    best_mult8, best_any = 0, 0
    for d in range(1, max_rows + 1):
        if R % d == 0:
            best_any = d
            if d % 8 == 0:
                best_mult8 = d
    if best_mult8 > 0:
        return best_mult8             # prefer sublane-aligned row tiles
    if best_any > 0:
        return best_any
    return R                          # fall back to full extent (tiny R or huge LW)


# --------------------------------------------------------------------------- wrapper
def grid_generator_forward(nbatch=1, spatial_size=(16, 16), specified_grid=None):
    """JAX/Pallas equivalent of GridGenerator.forward (return_params=False, ndim=2).

    Returns pos_grid of shape (B, H, W, 2), values in [-1, 1] (grid_sample ready).
    """
    H, W = spatial_size
    ndim = len(spatial_size)
    assert ndim == 2, "this kernel implements the 2-D case"

    # ident*2 scales per axis (guard size==1 -> identity coord is 0 there)
    sx = 2.0 / max(W - 1, 1)          # x channel: varies along W
    sy = 2.0 / max(H - 1, 1)          # y channel: varies along H

    lane0 = W * ndim                  # natural interleaved lane width of one image row
    F = _pick_lane_fold(H, lane0)     # rows folded into the lane axis
    R = H // F                        # folded rows per image
    LW = F * lane0                    # lane width of the working view
    TR = _pick_row_block(R, LW)       # row tile
    grid = (nbatch, R // TR)

    # Per-lane identity constants for the interleaved (h_sub, w, chan) lane layout,
    # with the final "-1" already folded in:
    #   (ident*2 - 1)[row, lane] = lane_base_m1[lane] + folded_row * lane_ystep[lane]
    l = jnp.arange(LW, dtype=jnp.int32)
    chan = l % ndim
    wcol = (l // ndim) % W
    hsub = l // (ndim * W)
    lane_base_m1 = (jnp.where(chan == 0,
                              wcol.astype(jnp.float32) * jnp.float32(sx),
                              hsub.astype(jnp.float32) * jnp.float32(sy))
                    - 1.0)[None, :]
    lane_ystep = jnp.where(chan == 0, 0.0, F * sy).astype(jnp.float32)[None, :]

    lane_spec = pl.BlockSpec((1, LW), lambda b, r: (0, 0))
    slab_spec = pl.BlockSpec((None, TR, LW), lambda b, r: (b, r, 0))
    out_shape = jax.ShapeDtypeStruct((nbatch, R, LW), jnp.float32)
    cparams = pltpu.CompilerParams(dimension_semantics=("parallel", "parallel"))

    if specified_grid is None:
        # _generate_raw_grid path: no zeros materialized, no HBM read stream.
        pos_v = pl.pallas_call(
            _pos_identity_kernel,
            out_shape=out_shape,
            grid=grid,
            in_specs=[lane_spec, lane_spec],
            out_specs=slab_spec,
            compiler_params=cparams,
        )(lane_base_m1, lane_ystep)
    else:
        mov = specified_grid.astype(jnp.float32)
        assert mov.shape == (nbatch, H, W, ndim), (
            f"specified_grid must be (B, H, W, {ndim}), got {mov.shape}")
        mov_v = mov.reshape(nbatch, R, LW)      # zero-cost reshape (row-major merge)
        pos_v = pl.pallas_call(
            _pos_from_mov_kernel,
            out_shape=out_shape,
            grid=grid,
            in_specs=[lane_spec, lane_spec, slab_spec],
            out_specs=slab_spec,
            compiler_params=cparams,
        )(lane_base_m1, lane_ystep, mov_v)

    return pos_v.reshape(nbatch, H, W, ndim)    # zero-cost reshape back to NHWC layout


# --------------------------------------------------------------------------- reference
def _reference(mov):
    """Pure-JAX reference: (mov + identity_percentage) * 2 - 1."""
    B, H, W, _ = mov.shape
    xs = jnp.arange(W, dtype=jnp.float32) / jnp.float32(max(W - 1, 1))
    ys = jnp.arange(H, dtype=jnp.float32) / jnp.float32(max(H - 1, 1))
    ident = jnp.stack(
        [jnp.broadcast_to(xs[None, :], (H, W)),
         jnp.broadcast_to(ys[:, None], (H, W))],
        axis=-1,
    )  # (H, W, 2)
    return (mov + ident[None]) * 2.0 - 1.0


if __name__ == "__main__":
    key = jax.random.PRNGKey(0)
    B, H, W, ndim = 2, 16, 16, 2

    # Case 1: default forward (no specified_grid) -> identity sampling grid (write-only kernel).
    pos_identity = jax.block_until_ready(
        grid_generator_forward(nbatch=B, spatial_size=(H, W)))

    # Case 2: a small deterministic movement grid to exercise the mov + identity path.
    mov = 0.05 * jax.random.normal(key, (B, H, W, ndim), dtype=jnp.float32)
    pos_mov = jax.block_until_ready(
        grid_generator_forward(nbatch=B, spatial_size=(H, W), specified_grid=mov))

    # Case 3: non-power-of-two spatial size exercising the generic lane folding.
    mov3 = 0.1 * jax.random.normal(jax.random.PRNGKey(1), (1, 24, 20, ndim), jnp.float32)
    pos3 = jax.block_until_ready(
        grid_generator_forward(nbatch=1, spatial_size=(24, 20), specified_grid=mov3))

    # Correctness checks against the pure-JAX reference.
    ref_identity = _reference(jnp.zeros((B, H, W, ndim), jnp.float32))
    ref_mov = _reference(mov)
    ref3 = _reference(mov3)
    assert pos_identity.shape == (B, H, W, ndim)
    assert pos_identity.dtype == jnp.float32
    assert jnp.allclose(pos_identity, ref_identity, atol=1e-5)
    assert jnp.allclose(pos_mov, ref_mov, atol=1e-5)
    assert jnp.allclose(pos3, ref3, atol=1e-5)

    print("KERNEL_OK")
</pallas_src>

<mosaic_0001>
module attributes {stable_mosaic.version = 11 : i64} {
  func.func @_pos_identity_kernel(%arg0: i32, %arg1: i32, %arg2: memref<1x128xf32, #tpu.memory_space<vmem>>, %arg3: memref<1x128xf32, #tpu.memory_space<vmem>>, %arg4: memref<1x4x128xf32, #tpu.memory_space<vmem>>) attributes {dimension_semantics = [#tpu.dimension_semantics<parallel>, #tpu.dimension_semantics<parallel>], iteration_bounds = array<i64: 2, 1>, scalar_prefetch = 0 : i64, scratch_operands = 0 : i64, tpu.core_type = #tpu.core_type<tc>, window_params = [{pipeline_mode = #tpu.pipeline_mode<synchronous>, transform_indices = @transform_0, window_bounds = array<i64: 1, 128>}, {pipeline_mode = #tpu.pipeline_mode<synchronous>, transform_indices = @transform_1, window_bounds = array<i64: 1, 128>}, {transform_indices = @transform_2, window_bounds = array<i64: 1, 4, 128>}]} {
    %0 = tpu.iota {dimensions = array<i32: 0>} : vector<4x128xi32>
    %c4_i32 = arith.constant 4 : i32
    %1 = arith.muli %arg1, %c4_i32 : i32
    %2 = vector.broadcast %1 : i32 to vector<4x128xi32>
    %3 = arith.addi %0, %2 : vector<4x128xi32>
    %c0 = arith.constant 0 : index
    %c0_0 = arith.constant 0 : index
    %4 = vector.load %arg2[%c0, %c0_0] : memref<1x128xf32, #tpu.memory_space<vmem>>, vector<1x128xf32>
    %5 = arith.sitofp %3 : vector<4x128xi32> to vector<4x128xf32>
    %c0_1 = arith.constant 0 : index
    %c0_2 = arith.constant 0 : index
    %6 = vector.load %arg3[%c0_1, %c0_2] : memref<1x128xf32, #tpu.memory_space<vmem>>, vector<1x128xf32>
    %7 = vector.broadcast %6 : vector<1x128xf32> to vector<4x128xf32>
    %8 = arith.mulf %5, %7 : vector<4x128xf32>
    %9 = vector.broadcast %4 : vector<1x128xf32> to vector<4x128xf32>
    %10 = arith.addf %9, %8 : vector<4x128xf32>
    %c0_3 = arith.constant 0 : index
    %c0_4 = arith.constant 0 : index
    %c0_5 = arith.constant 0 : index
    %11 = vector.load %arg4[%c0_3, %c0_4, %c0_5] : memref<1x4x128xf32, #tpu.memory_space<vmem>>, vector<1x4x128xf32>
    %12 = vector.shape_cast %11 : vector<1x4x128xf32> to vector<4x128xf32>
    %13 = vector.shape_cast %10 : vector<4x128xf32> to vector<1x4x128xf32>
    tpu.vector_store %arg4[%c0_3, %c0_4, %c0_5], %13 {strides = array<i32>} : memref<1x4x128xf32, #tpu.memory_space<vmem>>, vector<1x4x128xf32>,
    return
  }
  func.func @transform_0(%arg0: i32, %arg1: i32) -> (i32, i32) {
    %c0_i32 = arith.constant 0 : i32
    %c0_i32_0 = arith.constant 0 : i32
    %c0_i32_1 = arith.constant 0 : i32
    return %c0_i32, %c0_i32_0 : i32, i32
  }
  func.func @transform_1(%arg0: i32, %arg1: i32) -> (i32, i32) {
    %c0_i32 = arith.constant 0 : i32
    %c0_i32_0 = arith.constant 0 : i32
    %c0_i32_1 = arith.constant 0 : i32
    return %c0_i32, %c0_i32_0 : i32, i32
  }
  func.func @transform_2(%arg0: i32, %arg1: i32) -> (i32, i32, i32) {
    %c0_i32 = arith.constant 0 : i32
    %c0_i32_0 = arith.constant 0 : i32
    return %arg0, %arg1, %c0_i32 : i32, i32, i32
  }
}

</mosaic_0001>

<llo_original>
// kernel: tpu_custom_call.1
$region0: #{tpu_custom_call.1}
  #allocation0 [shape = 'u32[]', space=smem, size = 0x4, offset = 0x4, fixed_abs, tag = 'smem constant byte address 0x4 - core index']
  #allocation1 [shape = 'u32[144,128]{1,0:T(1,128)}', space=vmem, size = 0x12000, scoped, tag = 'internal scratch']
  %s0 = inlined_call_operand.hbm [shape: f32[1,128], index: 0, kind: input, shape index: {}]
  %s1 = inlined_call_operand.vmem [shape: f32[1,128], index: 1, kind: input, shape index: {}]
  %s2 = inlined_call_operand.hbm [shape: f32[2,4,128], index: 2, kind: output, shape index: {}]
  %s3 = sld [smem:[#allocation0]]
  $region45: #{tpu_custom_call.1} parent=0
    _
  %s5 = ssub.s32 1, %s3
  %s6 = scalar_select 0, %s5, %s3
  $region1: #{tpu_custom_call.1} parent=0
    #allocation2 [shape = 'u8[512]{0}', space=vmem, size = 0x400, scoped, tag = 'input window, operand 0, single buffered']
    #allocation3 [shape = 's32[2]{0}', space=sflag, size = 0x8, scoped, tag = 'scoped memory for tpu_custom_call.1']
    #allocation4 [shape = 's32[2]{0}', space=sflag, size = 0x8, scoped, tag = 'scoped memory for tpu_custom_call.1']
    #allocation5 [shape = 'u8[4096]{0}', space=vmem, size = 0x1000, scoped, tag = 'output window, operand 0']
    %7 = vsyncpa [#allocation3], 0
    %8 = vsyncpa [#allocation4], 0
    %s9 = scalar_lea.sflag [#allocation4], 1
    %10 = vsyncpa %s9, 0
    loop: start=0, step=1, limit=4
    $region2: #{tpu_custom_call.1} parent=1 // loop_pre_header
      _
    $region3: #{tpu_custom_call.1} parent=1 // loop_header
      %s12 = sphi 0, %s16
      %p13 = scmp.ge.s32.totalorder %s12, 4
      %s19 = sphi 0, %s31
      %s20 = sphi 0, %s27
      %s21 = sphi 0, %s19
      %s22 = sphi 0, %s20
      %s23 = sphi 0, %s21
      %s24 = sphi 0, %s22
      %s32 = sphi 0, %s32
      %s34 = sphi 0, %s32
      %s35 = sphi 0, %s34
      %s49 = sphi 0, %s35
      %s53 = sphi 0, %s53
      %s55 = sphi 0, %s53
      %s56 = sphi 0, %s55
      %s70 = sphi 0, %s56
      %s78 = sphi 0, %s80
      %s81 = sphi 0, %s78
      %s82 = sphi 0, %s81
      %s98 = sphi 0, %s82
    $region4: #{tpu_custom_call.1} parent=1 // loop_header_branch
      %15 = sbr.rel (%p13) target = $region8
    $region5: #{tpu_custom_call.1} parent=1 // loop_body
      %s17 = ssub.s32 %s12, 1
      %s18 = ssub.s32 %s12, 2
      %s25 = sadd.s32 1, %s20
      %p26 = scmp.ge.s32.totalorder %s25, 1
      %s27 = scalar_select %p26, 0, %s25
      %s28 = sadd.s32 1, %s19
      %s29 = scalar_select %p26, %s28, %s19
      %p30 = scmp.ge.s32.totalorder %s29, 2
      %s31 = scalar_select %p30, 0, %s29
      %s33 = sadd.s32 %s32, 1
      %p36 = scmp.eq.s32.totalorder %s12, 1
      %p37 = scmp.ne.s32.totalorder %s32, %s34
      %p38 = scmp.eq.s32.totalorder %s12, 0
      %p39 = por %p37, %p38
      %p40 = scmp.ne.s32.totalorder %s32, %s34
      %p41 = scmp.eq.s32.totalorder %s17, 1
      %p42 = por %p40, %p41
      %p43 = scmp.ne.s32.totalorder %s34, %s35
      %p44 = scmp.eq.s32.totalorder %s17, 0
      %p45 = por %p43, %p44
      %p46 = scmp.ne.s32.totalorder %s34, %s35
      %p47 = scmp.eq.s32.totalorder %s18, 1
      %p48 = por %p46, %p47
      %p50 = scmp.ne.s32.totalorder %s35, %s49
      %p51 = scmp.eq.s32.totalorder %s18, 0
      %p52 = por %p50, %p51
      %s54 = sadd.s32 %s53, 1
      %p57 = scmp.eq.s32.totalorder %s12, 1
      %p58 = scmp.ne.s32.totalorder %s53, %s55
      %p59 = scmp.eq.s32.totalorder %s12, 0
      %p60 = por %p58, %p59
      %p61 = scmp.ne.s32.totalorder %s53, %s55
      %p62 = scmp.eq.s32.totalorder %s17, 1
      %p63 = por %p61, %p62
      %p64 = scmp.ne.s32.totalorder %s55, %s56
      %p65 = scmp.eq.s32.totalorder %s17, 0
      %p66 = por %p64, %p65
      %p67 = scmp.ne.s32.totalorder %s55, %s56
      %p68 = scmp.eq.s32.totalorder %s18, 1
      %p69 = por %p67, %p68
      %p71 = scmp.ne.s32.totalorder %s56, %s70
      %p72 = scmp.eq.s32.totalorder %s18, 0
      %p73 = por %p71, %p72
      %s74 = ssub.s32 %s19, %s31
      %s75 = ssub.s32 %s20, %s27
      %s76 = sor.u32 %s74, %s75
      %p77 = scmp.eq.s32.totalorder %s76, 0
      %s79 = sadd.s32 %s78, 1
      %s80 = scalar_select %p77, %s78, %s79
      %p83 = pneg %p77
      %p84 = scmp.eq.s32.totalorder %s12, 1
      %p85 = por %p83, %p84
      %p86 = scmp.ne.s32.totalorder %s78, %s81
      %p87 = scmp.eq.s32.totalorder %s12, 0
      %p88 = por %p86, %p87
      %p89 = scmp.ne.s32.totalorder %s78, %s81
      %p90 = scmp.eq.s32.totalorder %s17, 1
      %p91 = por %p89, %p90
      %p92 = scmp.ne.s32.totalorder %s81, %s82
      %p93 = scmp.eq.s32.totalorder %s17, 0
      %p94 = por %p92, %p93
      %p95 = scmp.ne.s32.totalorder %s81, %s82
      %p96 = scmp.eq.s32.totalorder %s18, 1
      %p97 = por %p95, %p96
      %p99 = scmp.ne.s32.totalorder %s82, %s98
      %p100 = scmp.eq.s32.totalorder %s18, 0
      %p101 = por %p99, %p100
      %p102 = scmp.le.s32.totalorder 1, %s12
      %p103 = scmp.lt.s32.totalorder %s12, 3
      %p104 = pnand %p102, %p103
      %p105 = pneg %p104
      // Predicated region
      $region9: #{tpu_custom_call.1} parent=5 // pred_check
        _
      $region10: #{tpu_custom_call.1} parent=5 // pred_check_branch
        %107 = sbr.rel (%p104) target = $region12
      $region11: #{tpu_custom_call.1} parent=5 // pred_region
        %s108 = ssub.s32 %s12, 1
        // Predicated region
        $region13: #{tpu_custom_call.1} parent=11 // pred_check
          %p109 = pneg %p45
        $region14: #{tpu_custom_call.1} parent=11 // pred_check_branch
          %111 = sbr.rel (%p109) target = $region16
        $region15: #{tpu_custom_call.1} parent=11 // pred_region
          %s113 = ssub.s32 16, 16
          %114 = vsyncadd [#allocation3], %s113
          %s116 = sshll.u32 [#allocation2], 4
          %s117 = int_to_ptr.vmem [resolvable:$true] %s116
          %119 = dma.hbm_to_vmem [thread:$0]  %s0, 16, %s117, [#allocation3]
        $region16: #{tpu_custom_call.1} parent=11 // pred_fallthru
          _
        // Predicated region
        $region17: #{tpu_custom_call.1} parent=11 // pred_check
          %p120 = pneg %p66
        $region18: #{tpu_custom_call.1} parent=11 // pred_check_branch
          %122 = sbr.rel (%p120) target = $region20
        $region19: #{tpu_custom_call.1} parent=11 // pred_region
          _
        $region20: #{tpu_custom_call.1} parent=11 // pred_fallthru
          _
      $region12: #{tpu_custom_call.1} parent=5 // pred_fallthru
        _
      %p123 = scmp.lt.s32.totalorder %s12, 2
      // Predicated region
      $region21: #{tpu_custom_call.1} parent=5 // pred_check
        %p124 = pneg %p123
      $region22: #{tpu_custom_call.1} parent=5 // pred_check_branch
        %126 = sbr.rel (%p124) target = $region24
      $region23: #{tpu_custom_call.1} parent=5 // pred_region
        _
      $region24: #{tpu_custom_call.1} parent=5 // pred_fallthru
        _
      %p127 = scmp.le.s32.totalorder 1, %s12
      %p128 = scmp.lt.s32.totalorder %s12, 3
      %p129 = pnand %p127, %p128
      %p130 = pneg %p129
      // Predicated region
      $region25: #{tpu_custom_call.1} parent=5 // pred_check
        _
      $region26: #{tpu_custom_call.1} parent=5 // pred_check_branch
        %132 = sbr.rel (%p129) target = $region28
      $region27: #{tpu_custom_call.1} parent=5 // pred_region
        %s133 = ssub.s32 %s12, 1
        // Predicated region
        $region29: #{tpu_custom_call.1} parent=27 // pred_check
          %p134 = pneg %p45
        $region30: #{tpu_custom_call.1} parent=27 // pred_check_branch
          %136 = sbr.rel (%p134) target = $region32
        $region31: #{tpu_custom_call.1} parent=27 // pred_region
          %137 = dma.done [#allocation3], 16
        $region32: #{tpu_custom_call.1} parent=27 // pred_fallthru
          _
        %p138 = pneg %p45
        %p139 = pneg %p42
        %p140 = pneg %p66
        %p141 = pneg %p63
        %p142 = pneg %p94
        %p143 = pneg %p91
        %s144 = sand.u32 %s81, 1
        %s145 = scalar_lea.sflag [#allocation4], %s144
        %s146 = sand.u32 %s81, 1
        %s147 = smul.addr %s146, 4
        %s148 = scalar_lea.vmem [#allocation5], %s147
        %v149 = vlaneseq
        %v150 = vshrl.u32 %v149, 7
        %s151 = smul.u32 %s22, 4
        %v152 = vstv %s151
        %v153 = vadd.s32 %v150, %v152
        %v154 = vld [vmem:[#allocation2] sm:$0x1]
        %v155 = vcvt.s32.f32 %v153
        %v156 = vld [vmem:[%s1] sm:$0x1]
        %v158 = vlaneseq
        %v159 = vshrl.u32 %v158, 7
        %v160 = vsub.s32 0, %v159
        %v161 = vrot.slane %v156, %v160
        %v163 = vmul.f32 %v155, %v161
        %v165 = vlaneseq
        %v166 = vshrl.u32 %v165, 7
        %v167 = vsub.s32 0, %v166
        %v168 = vrot.slane %v154, %v167
        %v170 = vadd.f32 %v168, %v163
        %171 = vst [vmem:[%s148] sm:$0xf] %v170
        %s172 = sand.u32 %s81, 1
        %s173 = scalar_lea.sflag [#allocation4], %s172
        %s174 = sand.u32 %s81, 1
        %s175 = smul.addr %s174, 4
        %s176 = scalar_lea.vmem [#allocation5], %s175
        // Predicated region
        $region33: #{tpu_custom_call.1} parent=27 // pred_check
          %p177 = pneg %p91
        $region34: #{tpu_custom_call.1} parent=27 // pred_check_branch
          %179 = sbr.rel (%p177) target = $region36
        $region35: #{tpu_custom_call.1} parent=27 // pred_region
          %s181 = ssub.s32 64, 64
          %182 = vsyncadd %s173, %s181
          %s183 = sadd.s32 %s22, %s21
          %s184 = smul.addr %s183, 64
          %s185 = scalar_lea.hbm %s2, %s184
          %s187 = sshll.u32 %s176, 4
          %s188 = int_to_ptr.vmem [resolvable:$true] %s187
          %190 = dma.vmem_to_hbm [thread:$0]  %s188, 64, %s185, %s173
        $region36: #{tpu_custom_call.1} parent=27 // pred_fallthru
          _
      $region28: #{tpu_custom_call.1} parent=5 // pred_fallthru
        _
      %p191 = scmp.le.s32.totalorder 2, %s12
      // Predicated region
      $region37: #{tpu_custom_call.1} parent=5 // pred_check
        %p192 = pneg %p191
      $region38: #{tpu_custom_call.1} parent=5 // pred_check_branch
        %194 = sbr.rel (%p192) target = $region40
      $region39: #{tpu_custom_call.1} parent=5 // pred_region
        %s195 = ssub.s32 %s12, 2
        // Predicated region
        $region41: #{tpu_custom_call.1} parent=39 // pred_check
          %p196 = pneg %p97
        $region42: #{tpu_custom_call.1} parent=39 // pred_check_branch
          %198 = sbr.rel (%p196) target = $region44
        $region43: #{tpu_custom_call.1} parent=39 // pred_region
          %s199 = sand.u32 %s82, 1
          %s200 = scalar_lea.sflag [#allocation4], %s199
          %s201 = sand.u32 %s82, 1
          %s202 = smul.addr %s201, 4
          %s203 = scalar_lea.vmem [#allocation5], %s202
          %204 = dma.done %s200, 64
        $region44: #{tpu_custom_call.1} parent=39 // pred_fallthru
          _
      $region40: #{tpu_custom_call.1} parent=5 // pred_fallthru
        _
    $region6: #{tpu_custom_call.1} parent=1 // loop_footer
      %s16 = sadd.s32 1, %s12
    $region7: #{tpu_custom_call.1} parent=1 // loop_footer_branch
      %11 = sbr.rel target = $region3
    $region8: #{tpu_custom_call.1} parent=1 // loop_exit
      _
    %205 = vsyncpa [#allocation3], 1
    %s206 = scalar_lea.sflag [#allocation3], 1
    %207 = vsyncpa %s206, 1
    %208 = vsyncpa [#allocation4], 1
    %s209 = scalar_lea.sflag [#allocation4], 1
    %210 = vsyncpa %s209, 1

</llo_original>
